<compile_context>
chip_gen: v5e
topology: v5e:2x2
jax: 0.10.0
libtpu: 0.0.40
codegen_flags: <defaults>
</compile_context>

<pallas_src>
import jax
import jax.numpy as jnp
from jax.experimental import pallas as pl
from jax.experimental.pallas import tpu as pltpu


def _round_up(v, m):
    return ((v + m - 1) // m) * m


def _pick_tile(dim, pref, quantum):
    """Largest multiple of `quantum` <= min(pref, dim) that divides `dim`.

    `dim` must already be a multiple of `quantum`.
    """
    t = min(max(pref - pref % quantum, quantum), dim)
    while dim % t != 0:
        t -= quantum
    return t


def _vmem_cap_bytes():
    """Generation-aware VMEM limit cap: ~3/4 of physical VMEM, max 96 MiB."""
    try:
        cap = int(pltpu.get_tpu_info().vmem_capacity_bytes)
    except Exception:
        cap = 64 * 1024 * 1024  # safe assumption (v7x-sized)
    return min(cap * 3 // 4, 96 * 1024 * 1024)


def _nge_kernel_single(x_ref, w_ref, b_ref, o_ref):
    # Single reduction step: no accumulator scratch, no branches.
    # x_ref: (TM, K)   w_ref: (TN, K)   b_ref: (1, TN)   o_ref: (TM, TN)
    acc = jax.lax.dot_general(
        x_ref[...], w_ref[...],
        dimension_numbers=(((1,), (1,)), ((), ())),
        preferred_element_type=jnp.float32,
    )
    o_ref[...] = (acc + b_ref[...]).astype(o_ref.dtype)


def _nge_kernel_multi(x_ref, w_ref, b_ref, o_ref, acc_ref):
    # Multi-step reduction: f32 accumulator lives across the K grid axis.
    k = pl.program_id(2)

    @pl.when(k == 0)
    def _():
        acc_ref[...] = jnp.zeros_like(acc_ref)

    acc_ref[...] += jax.lax.dot_general(
        x_ref[...], w_ref[...],
        dimension_numbers=(((1,), (1,)), ((), ())),
        preferred_element_type=jnp.float32,
    )

    @pl.when(k == pl.num_programs(2) - 1)
    def _():
        o_ref[...] = (acc_ref[...] + b_ref[...]).astype(o_ref.dtype)


def nge_forward(x, weight, bias, *, tm=512, tn=256, tk=512, compute_dtype=None):
    """Pallas equivalent of NGE.forward(x, data) == nn.Linear(H, H)(x).

    x:      [..., H_in]
    weight: [H_out, H_in]   (PyTorch nn.Linear.weight layout, used as-is)
    bias:   [H_out]
    compute_dtype: optionally cast MXU inputs (e.g. jnp.bfloat16); accumulation
                   stays float32. Pays off for large, compute-bound H.
    """
    out_dtype = x.dtype
    lead_shape = x.shape[:-1]
    h_in = x.shape[-1]
    h_out, h_in_w = weight.shape
    assert h_in_w == h_in and bias.shape == (h_out,)

    x2 = x.reshape(-1, h_in)
    m = x2.shape[0]

    if compute_dtype is not None:
        x2 = x2.astype(compute_dtype)
        weight = weight.astype(compute_dtype)

    in_item = x2.dtype.itemsize
    out_item = jnp.dtype(out_dtype).itemsize

    # ---- K (in-feature / reduction) axis: never pad.
    # Tile only when h_in is a multiple of 128; otherwise one full-extent K block
    # (block last dim == full array dim is allowed).
    if h_in % 128 == 0:
        tk_e = _pick_tile(h_in, tk, 128)
    else:
        tk_e = h_in
    grid_k = h_in // tk_e
    multi_k = grid_k > 1

    # ---- N (out-feature) axis: avoid padding + post-slice for small h_out
    # (full-extent block; masked stores beat 4x padded HBM traffic); otherwise
    # lane-dense tiles, padding only when h_out > 128 and not a 128-multiple.
    if h_out % 128 == 0:
        np_ = h_out
        tn_e = _pick_tile(np_, tn, 128)
    elif h_out < 128:
        np_ = h_out
        tn_e = h_out
    else:
        np_ = _round_up(h_out, 128)
        tn_e = _pick_tile(np_, tn, 128)
    pad_n = np_ - h_out

    def tile_bytes(tm_c):
        b = 2 * (tm_c * tk_e + tn_e * tk_e) * in_item  # x (dbl-buf) + weight tile
        b += 2 * tn_e * 4                               # bias
        b += 2 * tm_c * tn_e * out_item                 # output double buffer
        if multi_k:
            b += tm_c * tn_e * 4                        # f32 accumulator
        return b

    # ---- M (row) axis: collapse to a single row tile when the whole problem fits
    # a modest VMEM budget (grid becomes (1,1) for the demo); otherwise a large row
    # tile (pref `tm`), shrinking by halves only if it busts the budget, and pad M
    # up to a multiple of the tile (never degrade to 8-row tiles).
    row_budget = 16 * 1024 * 1024
    mp8 = _round_up(m, 8)
    if mp8 <= 4096 and tile_bytes(mp8) <= row_budget:
        tm_e = mp8
    else:
        tm_e = max(_round_up(min(tm, mp8), 8), 8)
        while tm_e > 8 and tile_bytes(tm_e) > row_budget:
            tm_e = max(_round_up(tm_e // 2, 8), 8)
    mp = _round_up(mp8, tm_e)

    # ---- Wrapper-side padding (only what is strictly needed; none for the demo).
    x_p = x2 if mp == m else jnp.pad(x2, ((0, mp - m), (0, 0)))
    w_p = weight if pad_n == 0 else jnp.pad(weight, ((0, pad_n), (0, 0)))
    b_p = bias.astype(jnp.float32)
    if pad_n:
        b_p = jnp.pad(b_p, (0, pad_n))
    b_p = b_p.reshape(1, np_)

    vmem_limit = int(min(max(2 * tile_bytes(tm_e), 16 * 1024 * 1024),
                         _vmem_cap_bytes()))

    if not multi_k:
        # Single K step: 2-D grid, no accumulator scratch, fused epilogue.
        grid = (mp // tm_e, np_ // tn_e)
        y_p = pl.pallas_call(
            _nge_kernel_single,
            out_shape=jax.ShapeDtypeStruct((mp, np_), out_dtype),
            grid=grid,
            in_specs=[
                pl.BlockSpec((tm_e, h_in), lambda i, j: (i, 0)),  # x: streams over rows
                pl.BlockSpec((tn_e, h_in), lambda i, j: (j, 0)),  # W: row-axis invariant
                pl.BlockSpec((1, tn_e), lambda i, j: (0, j)),     # bias: row-axis invariant
            ],
            out_specs=pl.BlockSpec((tm_e, tn_e), lambda i, j: (i, j)),
            compiler_params=pltpu.CompilerParams(
                dimension_semantics=("parallel", "parallel"),
                vmem_limit_bytes=vmem_limit,
            ),
        )(x_p, w_p, b_p)
    else:
        # Multi-step reduction: K axis last and "arbitrary", f32 VMEM accumulator.
        grid = (mp // tm_e, np_ // tn_e, grid_k)
        y_p = pl.pallas_call(
            _nge_kernel_multi,
            out_shape=jax.ShapeDtypeStruct((mp, np_), out_dtype),
            grid=grid,
            in_specs=[
                pl.BlockSpec((tm_e, tk_e), lambda i, j, k: (i, k)),
                pl.BlockSpec((tn_e, tk_e), lambda i, j, k: (j, k)),
                pl.BlockSpec((1, tn_e), lambda i, j, k: (0, j)),
            ],
            out_specs=pl.BlockSpec((tm_e, tn_e), lambda i, j, k: (i, j)),
            scratch_shapes=[pltpu.VMEM((tm_e, tn_e), jnp.float32)],
            compiler_params=pltpu.CompilerParams(
                dimension_semantics=("parallel", "parallel", "arbitrary"),
                vmem_limit_bytes=vmem_limit,
            ),
        )(x_p, w_p, b_p)

    y = y_p
    if mp != m:
        y = y[:m]
    if np_ != h_out:
        y = y[:, :h_out]
    return y.reshape(*lead_shape, h_out)


if __name__ == "__main__":
    hidden_channels = 32
    num_nodes = 1024  # enough rows to give the GEMM real work; H stays small

    key = jax.random.PRNGKey(0)
    kx, kw, kb = jax.random.split(key, 3)

    x = jax.random.normal(kx, (num_nodes, hidden_channels), dtype=jnp.float32)
    weight = jax.random.normal(kw, (hidden_channels, hidden_channels),
                               dtype=jnp.float32) * 0.1
    bias = jax.random.normal(kb, (hidden_channels,), dtype=jnp.float32) * 0.1

    data = None  # unused by NGE.forward; kept for signature parity

    nge = jax.jit(nge_forward)
    out = nge(x, weight, bias)
    jax.block_until_ready(out)

    # Sanity check against a plain-JAX reference of nn.Linear.
    ref = jnp.dot(x, weight.T, precision=jax.lax.Precision.HIGHEST) + bias
    assert out.shape == ref.shape
    assert jnp.allclose(out, ref, atol=1e-4, rtol=1e-4), "mismatch vs reference"

    print("KERNEL_OK")
</pallas_src>

<mosaic_0001>
module attributes {stable_mosaic.version = 11 : i64} {
  func.func @_nge_kernel_single(%arg0: i32, %arg1: i32, %arg2: memref<1024x32xf32, #tpu.memory_space<vmem>>, %arg3: memref<32x32xf32, #tpu.memory_space<vmem>>, %arg4: memref<1x32xf32, #tpu.memory_space<vmem>>, %arg5: memref<1024x32xf32, #tpu.memory_space<vmem>>) attributes {dimension_semantics = [#tpu.dimension_semantics<parallel>, #tpu.dimension_semantics<parallel>], iteration_bounds = array<i64: 1, 1>, scalar_prefetch = 0 : i64, scratch_operands = 0 : i64, tpu.core_type = #tpu.core_type<tc>, window_params = [{transform_indices = @transform_0, window_bounds = array<i64: 1024, 32>}, {transform_indices = @transform_1, window_bounds = array<i64: 32, 32>}, {transform_indices = @transform_2, window_bounds = array<i64: 1, 32>}, {transform_indices = @transform_3, window_bounds = array<i64: 1024, 32>}]} {
    %c0 = arith.constant 0 : index
    %c0_0 = arith.constant 0 : index
    %0 = vector.load %arg2[%c0, %c0_0] : memref<1024x32xf32, #tpu.memory_space<vmem>>, vector<1024x32xf32>
    %c0_1 = arith.constant 0 : index
    %c0_2 = arith.constant 0 : index
    %1 = vector.load %arg3[%c0_1, %c0_2] : memref<32x32xf32, #tpu.memory_space<vmem>>, vector<32x32xf32>
    %cst = arith.constant dense<0.000000e+00> : vector<1024x32xf32>
    %2 = tpu.matmul %0, %1, %cst {dimension_numbers = #tpu.dot_dimension_numbers<[1], [1], [0], [0], [0, 0, 1, 0], [], []>} : vector<1024x32xf32>, vector<32x32xf32>, vector<1024x32xf32> -> vector<1024x32xf32>
    %c0_3 = arith.constant 0 : index
    %c0_4 = arith.constant 0 : index
    %3 = vector.load %arg4[%c0_3, %c0_4] : memref<1x32xf32, #tpu.memory_space<vmem>>, vector<1x32xf32>
    %4 = vector.broadcast %3 : vector<1x32xf32> to vector<1024x32xf32>
    %5 = arith.addf %2, %4 : vector<1024x32xf32>
    %c0_5 = arith.constant 0 : index
    %c0_6 = arith.constant 0 : index
    %6 = vector.load %arg5[%c0_5, %c0_6] : memref<1024x32xf32, #tpu.memory_space<vmem>>, vector<1024x32xf32>
    tpu.vector_store %arg5[%c0_5, %c0_6], %5 {strides = array<i32>} : memref<1024x32xf32, #tpu.memory_space<vmem>>, vector<1024x32xf32>,
    return
  }
  func.func @transform_0(%arg0: i32, %arg1: i32) -> (i32, i32) {
    %c0_i32 = arith.constant 0 : i32
    %c0_i32_0 = arith.constant 0 : i32
    return %arg0, %c0_i32 : i32, i32
  }
  func.func @transform_1(%arg0: i32, %arg1: i32) -> (i32, i32) {
    %c0_i32 = arith.constant 0 : i32
    %c0_i32_0 = arith.constant 0 : i32
    return %arg1, %c0_i32 : i32, i32
  }
  func.func @transform_2(%arg0: i32, %arg1: i32) -> (i32, i32) {
    %c0_i32 = arith.constant 0 : i32
    %c0_i32_0 = arith.constant 0 : i32
    return %c0_i32, %arg1 : i32, i32
  }
  func.func @transform_3(%arg0: i32, %arg1: i32) -> (i32, i32) {
    %c0_i32 = arith.constant 0 : i32
    return %arg0, %arg1 : i32, i32
  }
}

</mosaic_0001>

<llo_original>
// kernel: nge_forward.1
$region0: #{nge_forward.1}
  #allocation0 [shape = 'u32[]', space=smem, size = 0x4, offset = 0x4, fixed_abs, tag = 'smem constant byte address 0x4 - core index']
  #allocation1 [shape = 'u32[72,128]{1,0:T(1,128)}', space=vmem, size = 0x9000, scoped, tag = 'internal scratch']
  %s0 = inlined_call_operand.vmem [shape: f32[1024,32], index: 0, kind: input, shape index: {}]
  %s1 = inlined_call_operand.vmem [shape: f32[32,32], index: 1, kind: input, shape index: {}]
  %s2 = inlined_call_operand.vmem [shape: f32[1,32], index: 2, kind: input, shape index: {}]
  %s3 = inlined_call_operand.vmem [shape: f32[1024,32], index: 3, kind: output, shape index: {}]
  %s4 = sld [smem:[#allocation0]]
  $region22: #{nge_forward.1} parent=0
    _
  %s6 = ssub.s32 1, %s4
  %s7 = scalar_select 0, %s6, %s4
  // Predicated region
  $region2: #{nge_forward.1} parent=0 // pred_check
    _
  $region3: #{nge_forward.1} parent=0 // pred_check_branch
    %9 = sbr.rel (0) target = $region5
  $region4: #{nge_forward.1} parent=0 // pred_region
    _
  $region5: #{nge_forward.1} parent=0 // pred_fallthru
    _
  // Predicated region
  $region6: #{nge_forward.1} parent=0 // pred_check
    _
  $region7: #{nge_forward.1} parent=0 // pred_check_branch
    %11 = sbr.rel (0) target = $region9
  $region8: #{nge_forward.1} parent=0 // pred_region
    _
  $region9: #{nge_forward.1} parent=0 // pred_fallthru
    _
  // Predicated region
  $region10: #{nge_forward.1} parent=0 // pred_check
    _
  $region11: #{nge_forward.1} parent=0 // pred_check_branch
    %13 = sbr.rel (0) target = $region13
  $region12: #{nge_forward.1} parent=0 // pred_region
    _
  $region13: #{nge_forward.1} parent=0 // pred_fallthru
    _
  %v14 = vld [vmem:[%s0] sm:$0xff]
  %v15 = vld [vmem:[%s0 + $0x8] sm:$0xff]
  %v16 = vld [vmem:[%s0 + $0x10] sm:$0xff]
  %v17 = vld [vmem:[%s0 + $0x18] sm:$0xff]
  %v18 = vld [vmem:[%s0 + $0x20] sm:$0xff]
  %v19 = vld [vmem:[%s0 + $0x28] sm:$0xff]
  %v20 = vld [vmem:[%s0 + $0x30] sm:$0xff]
  %v21 = vld [vmem:[%s0 + $0x38] sm:$0xff]
  %v22 = vld [vmem:[%s0 + $0x40] sm:$0xff]
  %v23 = vld [vmem:[%s0 + $0x48] sm:$0xff]
  %v24 = vld [vmem:[%s0 + $0x50] sm:$0xff]
  %v25 = vld [vmem:[%s0 + $0x58] sm:$0xff]
  %v26 = vld [vmem:[%s0 + $0x60] sm:$0xff]
  %v27 = vld [vmem:[%s0 + $0x68] sm:$0xff]
  %v28 = vld [vmem:[%s0 + $0x70] sm:$0xff]
  %v29 = vld [vmem:[%s0 + $0x78] sm:$0xff]
  %v30 = vld [vmem:[%s0 + $0x80] sm:$0xff]
  %v31 = vld [vmem:[%s0 + $0x88] sm:$0xff]
  %v32 = vld [vmem:[%s0 + $0x90] sm:$0xff]
  %v33 = vld [vmem:[%s0 + $0x98] sm:$0xff]
  %v34 = vld [vmem:[%s0 + $0xa0] sm:$0xff]
  %v35 = vld [vmem:[%s0 + $0xa8] sm:$0xff]
  %v36 = vld [vmem:[%s0 + $0xb0] sm:$0xff]
  %v37 = vld [vmem:[%s0 + $0xb8] sm:$0xff]
  %v38 = vld [vmem:[%s0 + $0xc0] sm:$0xff]
  %v39 = vld [vmem:[%s0 + $0xc8] sm:$0xff]
  %v40 = vld [vmem:[%s0 + $0xd0] sm:$0xff]
  %v41 = vld [vmem:[%s0 + $0xd8] sm:$0xff]
  %v42 = vld [vmem:[%s0 + $0xe0] sm:$0xff]
  %v43 = vld [vmem:[%s0 + $0xe8] sm:$0xff]
  %v44 = vld [vmem:[%s0 + $0xf0] sm:$0xff]
  %v45 = vld [vmem:[%s0 + $0xf8] sm:$0xff]
  %v46 = vld [vmem:[%s0 + $0x100] sm:$0xff]
  %v47 = vld [vmem:[%s0 + $0x108] sm:$0xff]
  %v48 = vld [vmem:[%s0 + $0x110] sm:$0xff]
  %v49 = vld [vmem:[%s0 + $0x118] sm:$0xff]
  %v50 = vld [vmem:[%s0 + $0x120] sm:$0xff]
  %v51 = vld [vmem:[%s0 + $0x128] sm:$0xff]
  %v52 = vld [vmem:[%s0 + $0x130] sm:$0xff]
  %v53 = vld [vmem:[%s0 + $0x138] sm:$0xff]
  %v54 = vld [vmem:[%s0 + $0x140] sm:$0xff]
  %v55 = vld [vmem:[%s0 + $0x148] sm:$0xff]
  %v56 = vld [vmem:[%s0 + $0x150] sm:$0xff]
  %v57 = vld [vmem:[%s0 + $0x158] sm:$0xff]
  %v58 = vld [vmem:[%s0 + $0x160] sm:$0xff]
  %v59 = vld [vmem:[%s0 + $0x168] sm:$0xff]
  %v60 = vld [vmem:[%s0 + $0x170] sm:$0xff]
  %v61 = vld [vmem:[%s0 + $0x178] sm:$0xff]
  %v62 = vld [vmem:[%s0 + $0x180] sm:$0xff]
  %v63 = vld [vmem:[%s0 + $0x188] sm:$0xff]
  %v64 = vld [vmem:[%s0 + $0x190] sm:$0xff]
  %v65 = vld [vmem:[%s0 + $0x198] sm:$0xff]
  %v66 = vld [vmem:[%s0 + $0x1a0] sm:$0xff]
  %v67 = vld [vmem:[%s0 + $0x1a8] sm:$0xff]
  %v68 = vld [vmem:[%s0 + $0x1b0] sm:$0xff]
  %v69 = vld [vmem:[%s0 + $0x1b8] sm:$0xff]
  %v70 = vld [vmem:[%s0 + $0x1c0] sm:$0xff]
  %v71 = vld [vmem:[%s0 + $0x1c8] sm:$0xff]
  %v72 = vld [vmem:[%s0 + $0x1d0] sm:$0xff]
  %v73 = vld [vmem:[%s0 + $0x1d8] sm:$0xff]
  %v74 = vld [vmem:[%s0 + $0x1e0] sm:$0xff]
  %v75 = vld [vmem:[%s0 + $0x1e8] sm:$0xff]
  %v76 = vld [vmem:[%s0 + $0x1f0] sm:$0xff]
  %v77 = vld [vmem:[%s0 + $0x1f8] sm:$0xff]
  %v78 = vld [vmem:[%s0 + $0x200] sm:$0xff]
  %v79 = vld [vmem:[%s0 + $0x208] sm:$0xff]
  %v80 = vld [vmem:[%s0 + $0x210] sm:$0xff]
  %v81 = vld [vmem:[%s0 + $0x218] sm:$0xff]
  %v82 = vld [vmem:[%s0 + $0x220] sm:$0xff]
  %v83 = vld [vmem:[%s0 + $0x228] sm:$0xff]
  %v84 = vld [vmem:[%s0 + $0x230] sm:$0xff]
  %v85 = vld [vmem:[%s0 + $0x238] sm:$0xff]
  %v86 = vld [vmem:[%s0 + $0x240] sm:$0xff]
  %v87 = vld [vmem:[%s0 + $0x248] sm:$0xff]
  %v88 = vld [vmem:[%s0 + $0x250] sm:$0xff]
  %v89 = vld [vmem:[%s0 + $0x258] sm:$0xff]
  %v90 = vld [vmem:[%s0 + $0x260] sm:$0xff]
  %v91 = vld [vmem:[%s0 + $0x268] sm:$0xff]
  %v92 = vld [vmem:[%s0 + $0x270] sm:$0xff]
  %v93 = vld [vmem:[%s0 + $0x278] sm:$0xff]
  %v94 = vld [vmem:[%s0 + $0x280] sm:$0xff]
  %v95 = vld [vmem:[%s0 + $0x288] sm:$0xff]
  %v96 = vld [vmem:[%s0 + $0x290] sm:$0xff]
  %v97 = vld [vmem:[%s0 + $0x298] sm:$0xff]
  %v98 = vld [vmem:[%s0 + $0x2a0] sm:$0xff]
  %v99 = vld [vmem:[%s0 + $0x2a8] sm:$0xff]
  %v100 = vld [vmem:[%s0 + $0x2b0] sm:$0xff]
  %v101 = vld [vmem:[%s0 + $0x2b8] sm:$0xff]
  %v102 = vld [vmem:[%s0 + $0x2c0] sm:$0xff]
  %v103 = vld [vmem:[%s0 + $0x2c8] sm:$0xff]
  %v104 = vld [vmem:[%s0 + $0x2d0] sm:$0xff]
  %v105 = vld [vmem:[%s0 + $0x2d8] sm:$0xff]
  %v106 = vld [vmem:[%s0 + $0x2e0] sm:$0xff]
  %v107 = vld [vmem:[%s0 + $0x2e8] sm:$0xff]
  %v108 = vld [vmem:[%s0 + $0x2f0] sm:$0xff]
  %v109 = vld [vmem:[%s0 + $0x2f8] sm:$0xff]
  %v110 = vld [vmem:[%s0 + $0x300] sm:$0xff]
  %v111 = vld [vmem:[%s0 + $0x308] sm:$0xff]
  %v112 = vld [vmem:[%s0 + $0x310] sm:$0xff]
  %v113 = vld [vmem:[%s0 + $0x318] sm:$0xff]
  %v114 = vld [vmem:[%s0 + $0x320] sm:$0xff]
  %v115 = vld [vmem:[%s0 + $0x328] sm:$0xff]
  %v116 = vld [vmem:[%s0 + $0x330] sm:$0xff]
  %v117 = vld [vmem:[%s0 + $0x338] sm:$0xff]
  %v118 = vld [vmem:[%s0 + $0x340] sm:$0xff]
  %v119 = vld [vmem:[%s0 + $0x348] sm:$0xff]
  %v120 = vld [vmem:[%s0 + $0x350] sm:$0xff]
  %v121 = vld [vmem:[%s0 + $0x358] sm:$0xff]
  %v122 = vld [vmem:[%s0 + $0x360] sm:$0xff]
  %v123 = vld [vmem:[%s0 + $0x368] sm:$0xff]
  %v124 = vld [vmem:[%s0 + $0x370] sm:$0xff]
  %v125 = vld [vmem:[%s0 + $0x378] sm:$0xff]
  %v126 = vld [vmem:[%s0 + $0x380] sm:$0xff]
  %v127 = vld [vmem:[%s0 + $0x388] sm:$0xff]
  %v128 = vld [vmem:[%s0 + $0x390] sm:$0xff]
  %v129 = vld [vmem:[%s0 + $0x398] sm:$0xff]
  %v130 = vld [vmem:[%s0 + $0x3a0] sm:$0xff]
  %v131 = vld [vmem:[%s0 + $0x3a8] sm:$0xff]
  %v132 = vld [vmem:[%s0 + $0x3b0] sm:$0xff]
  %v133 = vld [vmem:[%s0 + $0x3b8] sm:$0xff]
  %v134 = vld [vmem:[%s0 + $0x3c0] sm:$0xff]
  %v135 = vld [vmem:[%s0 + $0x3c8] sm:$0xff]
  %v136 = vld [vmem:[%s0 + $0x3d0] sm:$0xff]
  %v137 = vld [vmem:[%s0 + $0x3d8] sm:$0xff]
  %v138 = vld [vmem:[%s0 + $0x3e0] sm:$0xff]
  %v139 = vld [vmem:[%s0 + $0x3e8] sm:$0xff]
  %v140 = vld [vmem:[%s0 + $0x3f0] sm:$0xff]
  %v141 = vld [vmem:[%s0 + $0x3f8] sm:$0xff]
  %v142 = vld [vmem:[%s1] sm:$0xff]
  %v143 = vld [vmem:[%s1 + $0x8] sm:$0xff]
  %v144 = vld [vmem:[%s1 + $0x10] sm:$0xff]
  %v145 = vld [vmem:[%s1 + $0x18] sm:$0xff]
  %v146 = vld [vmem:[%s2] sm:$0x1]
  %v148 = vperm.slane %v146, 0
  %vm150 = vcmask 261120
  %v152 = vsel %vm150, %v14, 0
  %v155 = vsel %vm150, %v15, 0
  %v158 = vsel %vm150, %v16, 0
  %v161 = vsel %vm150, %v17, 0
  %v164 = vsel %vm150, %v18, 0
  %v167 = vsel %vm150, %v19, 0
  %v170 = vsel %vm150, %v20, 0
  %v173 = vsel %vm150, %v21, 0
  %v176 = vsel %vm150, %v22, 0
  %v179 = vsel %vm150, %v23, 0
  %v182 = vsel %vm150, %v24, 0
  %v185 = vsel %vm150, %v25, 0
  %v188 = vsel %vm150, %v26, 0
  %v191 = vsel %vm150, %v27, 0
  %v194 = vsel %vm150, %v28, 0
  %v197 = vsel %vm150, %v29, 0
  %v200 = vsel %vm150, %v30, 0
  %v203 = vsel %vm150, %v31, 0
  %v206 = vsel %vm150, %v32, 0
  %v209 = vsel %vm150, %v33, 0
  %v212 = vsel %vm150, %v34, 0
  %v215 = vsel %vm150, %v35, 0
  %v218 = vsel %vm150, %v36, 0
  %v221 = vsel %vm150, %v37, 0
  %v224 = vsel %vm150, %v38, 0
  %v227 = vsel %vm150, %v39, 0
  %v230 = vsel %vm150, %v40, 0
  %v233 = vsel %vm150, %v41, 0
  %v236 = vsel %vm150, %v42, 0
  %v239 = vsel %vm150, %v43, 0
  %v242 = vsel %vm150, %v44, 0
  %v245 = vsel %vm150, %v45, 0
  %v248 = vsel %vm150, %v46, 0
  %v251 = vsel %vm150, %v47, 0
  %v254 = vsel %vm150, %v48, 0
  %v257 = vsel %vm150, %v49, 0
  %v260 = vsel %vm150, %v50, 0
  %v263 = vsel %vm150, %v51, 0
  %v266 = vsel %vm150, %v52, 0
  %v269 = vsel %vm150, %v53, 0
  %v272 = vsel %vm150, %v54, 0
  %v275 = vsel %vm150, %v55, 0
  %v278 = vsel %vm150, %v56, 0
  %v281 = vsel %vm150, %v57, 0
  %v284 = vsel %vm150, %v58, 0
  %v287 = vsel %vm150, %v59, 0
  %v290 = vsel %vm150, %v60, 0
  %v293 = vsel %vm150, %v61, 0
  %v296 = vsel %vm150, %v62, 0
  %v299 = vsel %vm150, %v63, 0
  %v302 = vsel %vm150, %v64, 0
  %v305 = vsel %vm150, %v65, 0
  %v308 = vsel %vm150, %v66, 0
  %v311 = vsel %vm150, %v67, 0
  %v314 = vsel %vm150, %v68, 0
  %v317 = vsel %vm150, %v69, 0
  %v320 = vsel %vm150, %v70, 0
  %v323 = vsel %vm150, %v71, 0
  %v326 = vsel %vm150, %v72, 0
  %v329 = vsel %vm150, %v73, 0
  %v332 = vsel %vm150, %v74, 0
  %v335 = vsel %vm150, %v75, 0
  %v338 = vsel %vm150, %v76, 0
  %v341 = vsel %vm150, %v77, 0
  %v344 = vsel %vm150, %v78, 0
  %v347 = vsel %vm150, %v79, 0
  %v350 = vsel %vm150, %v80, 0
  %v353 = vsel %vm150, %v81, 0
  %v356 = vsel %vm150, %v82, 0
  %v359 = vsel %vm150, %v83, 0
  %v362 = vsel %vm150, %v84, 0
  %v365 = vsel %vm150, %v85, 0
  %v368 = vsel %vm150, %v86, 0
  %v371 = vsel %vm150, %v87, 0
  %v374 = vsel %vm150, %v88, 0
  %v377 = vsel %vm150, %v89, 0
  %v380 = vsel %vm150, %v90, 0
  %v383 = vsel %vm150, %v91, 0
  %v386 = vsel %vm150, %v92, 0
  %v389 = vsel %vm150, %v93, 0
  %v392 = vsel %vm150, %v94, 0
  %v395 = vsel %vm150, %v95, 0
  %v398 = vsel %vm150, %v96, 0
  %v401 = vsel %vm150, %v97, 0
  %v404 = vsel %vm150, %v98, 0
  %v407 = vsel %vm150, %v99, 0
  %v410 = vsel %vm150, %v100, 0
  %v413 = vsel %vm150, %v101, 0
  %v416 = vsel %vm150, %v102, 0
  %v419 = vsel %vm150, %v103, 0
  %v422 = vsel %vm150, %v104, 0
  %v425 = vsel %vm150, %v105, 0
  %v428 = vsel %vm150, %v106, 0
  %v431 = vsel %vm150, %v107, 0
  %v434 = vsel %vm150, %v108, 0
  %v437 = vsel %vm150, %v109, 0
  %v440 = vsel %vm150, %v110, 0
  %v443 = vsel %vm150, %v111, 0
  %v446 = vsel %vm150, %v112, 0
  %v449 = vsel %vm150, %v113, 0
  %v452 = vsel %vm150, %v114, 0
  %v455 = vsel %vm150, %v115, 0
  %v458 = vsel %vm150, %v116, 0
  %v461 = vsel %vm150, %v117, 0
  %v464 = vsel %vm150, %v118, 0
  %v467 = vsel %vm150, %v119, 0
  %v470 = vsel %vm150, %v120, 0
  %v473 = vsel %vm150, %v121, 0
  %v476 = vsel %vm150, %v122, 0
  %v479 = vsel %vm150, %v123, 0
  %v482 = vsel %vm150, %v124, 0
  %v485 = vsel %vm150, %v125, 0
  %v488 = vsel %vm150, %v126, 0
  %v491 = vsel %vm150, %v127, 0
  %v494 = vsel %vm150, %v128, 0
  %v497 = vsel %vm150, %v129, 0
  %v500 = vsel %vm150, %v130, 0
  %v503 = vsel %vm150, %v131, 0
  %v506 = vsel %vm150, %v132, 0
  %v509 = vsel %vm150, %v133, 0
  %v512 = vsel %vm150, %v134, 0
  %v515 = vsel %vm150, %v135, 0
  %v518 = vsel %vm150, %v136, 0
  %v521 = vsel %vm150, %v137, 0
  %v524 = vsel %vm150, %v138, 0
  %v527 = vsel %vm150, %v139, 0
  %v530 = vsel %vm150, %v140, 0
  %v533 = vsel %vm150, %v141, 0
  %v536 = vsel %vm150, %v142, 0
  %v539 = vsel %vm150, %v143, 0
  %v542 = vsel %vm150, %v144, 0
  %v545 = vsel %vm150, %v145, 0
  %547 = vmatpush.xpose.msra.mxu0 0.0
  %548 = vmatpush.xpose.msra.mxu0 0.0
  %549 = vmatpush.xpose.msra.mxu0 0.0
  %550 = vmatpush.xpose.msra.mxu0 0.0
  %551 = vmatpush.xpose.msra.mxu0 0.0
  %552 = vmatpush.xpose.msra.mxu0 0.0
  %553 = vmatpush.xpose.msra.mxu0 0.0
  %554 = vmatpush.xpose.msra.mxu0 0.0
  %555 = vmatpush.xpose.msra.mxu0 0.0
  %556 = vmatpush.xpose.msra.mxu0 0.0
  %557 = vmatpush.xpose.msra.mxu0 0.0
  %558 = vmatpush.xpose.msra.mxu0 0.0
  %559 = vmatpush.xpose.msra.mxu0 %v545
  %560 = vmatpush.xpose.msra.mxu0 %v542
  %561 = vmatpush.xpose.msra.mxu0 %v539
  %562 = vmatpush.xpose.msra.mxu0 %v536
  %563 = vmatmul.f32.gmra.mxu0 %v152
  %v564 = vpop.f32.mrf.mxu0
  %v565 = vadd.f32 %v148, %v564
  %566 = vmatmul.f32.gmra.mxu0 %v155
  %v567 = vpop.f32.mrf.mxu0
  %v568 = vadd.f32 %v148, %v567
  %569 = vmatmul.f32.gmra.mxu0 %v158
  %v570 = vpop.f32.mrf.mxu0
  %v571 = vadd.f32 %v148, %v570
  %572 = vmatmul.f32.gmra.mxu0 %v161
  %v573 = vpop.f32.mrf.mxu0
  %v574 = vadd.f32 %v148, %v573
  %575 = vmatmul.f32.gmra.mxu0 %v164
  %v576 = vpop.f32.mrf.mxu0
  %v577 = vadd.f32 %v148, %v576
  %578 = vmatmul.f32.gmra.mxu0 %v167
  %v579 = vpop.f32.mrf.mxu0
  %v580 = vadd.f32 %v148, %v579
  %581 = vmatmul.f32.gmra.mxu0 %v170
  %v582 = vpop.f32.mrf.mxu0
  %v583 = vadd.f32 %v148, %v582
  %584 = vmatmul.f32.gmra.mxu0 %v173
  %v585 = vpop.f32.mrf.mxu0
  %v586 = vadd.f32 %v148, %v585
  %587 = vmatmul.f32.gmra.mxu0 %v176
  %v588 = vpop.f32.mrf.mxu0
  %v589 = vadd.f32 %v148, %v588
  %590 = vmatmul.f32.gmra.mxu0 %v179
  %v591 = vpop.f32.mrf.mxu0
  %v592 = vadd.f32 %v148, %v591
  %593 = vmatmul.f32.gmra.mxu0 %v182
  %v594 = vpop.f32.mrf.mxu0
  %v595 = vadd.f32 %v148, %v594
  %596 = vmatmul.f32.gmra.mxu0 %v185
  %v597 = vpop.f32.mrf.mxu0
  %v598 = vadd.f32 %v148, %v597
  %599 = vmatmul.f32.gmra.mxu0 %v188
  %v600 = vpop.f32.mrf.mxu0
  %v601 = vadd.f32 %v148, %v600
  %602 = vmatmul.f32.gmra.mxu0 %v191
  %v603 = vpop.f32.mrf.mxu0
  %v604 = vadd.f32 %v148, %v603
  %605 = vmatmul.f32.gmra.mxu0 %v194
  %v606 = vpop.f32.mrf.mxu0
  %v607 = vadd.f32 %v148, %v606
  %608 = vmatmul.f32.gmra.mxu0 %v197
  %v609 = vpop.f32.mrf.mxu0
  %v610 = vadd.f32 %v148, %v609
  %611 = vmatmul.f32.gmra.mxu0 %v200
  %v612 = vpop.f32.mrf.mxu0
  %v613 = vadd.f32 %v148, %v612
  %614 = vmatmul.f32.gmra.mxu0 %v203
  %v615 = vpop.f32.mrf.mxu0
  %v616 = vadd.f32 %v148, %v615
  %617 = vmatmul.f32.gmra.mxu0 %v206
  %v618 = vpop.f32.mrf.mxu0
  %v619 = vadd.f32 %v148, %v618
  %620 = vmatmul.f32.gmra.mxu0 %v209
  %v621 = vpop.f32.mrf.mxu0
  %v622 = vadd.f32 %v148, %v621
  %623 = vmatmul.f32.gmra.mxu0 %v212
  %v624 = vpop.f32.mrf.mxu0
  %v625 = vadd.f32 %v148, %v624
  %626 = vmatmul.f32.gmra.mxu0 %v215
  %v627 = vpop.f32.mrf.mxu0
  %v628 = vadd.f32 %v148, %v627
  %629 = vmatmul.f32.gmra.mxu0 %v218
  %v630 = vpop.f32.mrf.mxu0
  %v631 = vadd.f32 %v148, %v630
  %632 = vmatmul.f32.gmra.mxu0 %v221
  %v633 = vpop.f32.mrf.mxu0
  %v634 = vadd.f32 %v148, %v633
  %635 = vmatmul.f32.gmra.mxu0 %v224
  %v636 = vpop.f32.mrf.mxu0
  %v637 = vadd.f32 %v148, %v636
  %638 = vmatmul.f32.gmra.mxu0 %v227
  %v639 = vpop.f32.mrf.mxu0
  %v640 = vadd.f32 %v148, %v639
  %641 = vmatmul.f32.gmra.mxu0 %v230
  %v642 = vpop.f32.mrf.mxu0
  %v643 = vadd.f32 %v148, %v642
  %644 = vmatmul.f32.gmra.mxu0 %v233
  %v645 = vpop.f32.mrf.mxu0
  %v646 = vadd.f32 %v148, %v645
  %647 = vmatmul.f32.gmra.mxu0 %v236
  %v648 = vpop.f32.mrf.mxu0
  %v649 = vadd.f32 %v148, %v648
  %650 = vmatmul.f32.gmra.mxu0 %v239
  %v651 = vpop.f32.mrf.mxu0
  %v652 = vadd.f32 %v148, %v651
  %653 = vmatmul.f32.gmra.mxu0 %v242
  %v654 = vpop.f32.mrf.mxu0
  %v655 = vadd.f32 %v148, %v654
  %656 = vmatmul.f32.gmra.mxu0 %v245
  %v657 = vpop.f32.mrf.mxu0
  %v658 = vadd.f32 %v148, %v657
  %659 = vmatmul.f32.gmra.mxu0 %v248
  %v660 = vpop.f32.mrf.mxu0
  %v661 = vadd.f32 %v148, %v660
  %662 = vmatmul.f32.gmra.mxu0 %v251
  %v663 = vpop.f32.mrf.mxu0
  %v664 = vadd.f32 %v148, %v663
  %665 = vmatmul.f32.gmra.mxu0 %v254
  %v666 = vpop.f32.mrf.mxu0
  %v667 = vadd.f32 %v148, %v666
  %668 = vmatmul.f32.gmra.mxu0 %v257
  %v669 = vpop.f32.mrf.mxu0
  %v670 = vadd.f32 %v148, %v669
  %671 = vmatmul.f32.gmra.mxu0 %v260
  %v672 = vpop.f32.mrf.mxu0
  %v673 = vadd.f32 %v148, %v672
  %674 = vmatmul.f32.gmra.mxu0 %v263
  %v675 = vpop.f32.mrf.mxu0
  %v676 = vadd.f32 %v148, %v675
  %677 = vmatmul.f32.gmra.mxu0 %v266
  %v678 = vpop.f32.mrf.mxu0
  %v679 = vadd.f32 %v148, %v678
  %680 = vmatmul.f32.gmra.mxu0 %v269
  %v681 = vpop.f32.mrf.mxu0
  %v682 = vadd.f32 %v148, %v681
  %683 = vmatmul.f32.gmra.mxu0 %v272
  %v684 = vpop.f32.mrf.mxu0
  %v685 = vadd.f32 %v148, %v684
  %686 = vmatmul.f32.gmra.mxu0 %v275
  %v687 = vpop.f32.mrf.mxu0
  %v688 = vadd.f32 %v148, %v687
  %689 = vmatmul.f32.gmra.mxu0 %v278
  %v690 = vpop.f32.mrf.mxu0
  %v691 = vadd.f32 %v148, %v690
  %692 = vmatmul.f32.gmra.mxu0 %v281
  %v693 = vpop.f32.mrf.mxu0
  %v694 = vadd.f32 %v148, %v693
  %695 = vmatmul.f32.gmra.mxu0 %v284
  %v696 = vpop.f32.mrf.mxu0
  %v697 = vadd.f32 %v148, %v696
  %698 = vmatmul.f32.gmra.mxu0 %v287
  %v699 = vpop.f32.mrf.mxu0
  %v700 = vadd.f32 %v148, %v699
  %701 = vmatmul.f32.gmra.mxu0 %v290
  %v702 = vpop.f32.mrf.mxu0
  %v703 = vadd.f32 %v148, %v702
  %704 = vmatmul.f32.gmra.mxu0 %v293
  %v705 = vpop.f32.mrf.mxu0
  %v706 = vadd.f32 %v148, %v705
  %707 = vmatmul.f32.gmra.mxu0 %v296
  %v708 = vpop.f32.mrf.mxu0
  %v709 = vadd.f32 %v148, %v708
  %710 = vmatmul.f32.gmra.mxu0 %v299
  %v711 = vpop.f32.mrf.mxu0
  %v712 = vadd.f32 %v148, %v711
  %713 = vmatmul.f32.gmra.mxu0 %v302
  %v714 = vpop.f32.mrf.mxu0
  %v715 = vadd.f32 %v148, %v714
  %716 = vmatmul.f32.gmra.mxu0 %v305
  %v717 = vpop.f32.mrf.mxu0
  %v718 = vadd.f32 %v148, %v717
  %719 = vmatmul.f32.gmra.mxu0 %v308
  %v720 = vpop.f32.mrf.mxu0
  %v721 = vadd.f32 %v148, %v720
  %722 = vmatmul.f32.gmra.mxu0 %v311
  %v723 = vpop.f32.mrf.mxu0
  %v724 = vadd.f32 %v148, %v723
  %725 = vmatmul.f32.gmra.mxu0 %v314
  %v726 = vpop.f32.mrf.mxu0
  %v727 = vadd.f32 %v148, %v726
  %728 = vmatmul.f32.gmra.mxu0 %v317
  %v729 = vpop.f32.mrf.mxu0
  %v730 = vadd.f32 %v148, %v729
  %731 = vmatmul.f32.gmra.mxu0 %v320
  %v732 = vpop.f32.mrf.mxu0
  %v733 = vadd.f32 %v148, %v732
  %734 = vmatmul.f32.gmra.mxu0 %v323
  %v735 = vpop.f32.mrf.mxu0
  %v736 = vadd.f32 %v148, %v735
  %737 = vmatmul.f32.gmra.mxu0 %v326
  %v738 = vpop.f32.mrf.mxu0
  %v739 = vadd.f32 %v148, %v738
  %740 = vmatmul.f32.gmra.mxu0 %v329
  %v741 = vpop.f32.mrf.mxu0
  %v742 = vadd.f32 %v148, %v741
  %743 = vmatmul.f32.gmra.mxu0 %v332
  %v744 = vpop.f32.mrf.mxu0
  %v745 = vadd.f32 %v148, %v744
  %746 = vmatmul.f32.gmra.mxu0 %v335
  %v747 = vpop.f32.mrf.mxu0
  %v748 = vadd.f32 %v148, %v747
  %749 = vmatmul.f32.gmra.mxu0 %v338
  %v750 = vpop.f32.mrf.mxu0
  %v751 = vadd.f32 %v148, %v750
  %752 = vmatmul.f32.gmra.mxu0 %v341
  %v753 = vpop.f32.mrf.mxu0
  %v754 = vadd.f32 %v148, %v753
  %755 = vmatmul.f32.gmra.mxu0 %v344
  %v756 = vpop.f32.mrf.mxu0
  %v757 = vadd.f32 %v148, %v756
  %758 = vmatmul.f32.gmra.mxu0 %v347
  %v759 = vpop.f32.mrf.mxu0
  %v760 = vadd.f32 %v148, %v759
  %761 = vmatmul.f32.gmra.mxu0 %v350
  %v762 = vpop.f32.mrf.mxu0
  %v763 = vadd.f32 %v148, %v762
  %764 = vmatmul.f32.gmra.mxu0 %v353
  %v765 = vpop.f32.mrf.mxu0
  %v766 = vadd.f32 %v148, %v765
  %767 = vmatmul.f32.gmra.mxu0 %v356
  %v768 = vpop.f32.mrf.mxu0
  %v769 = vadd.f32 %v148, %v768
  %770 = vmatmul.f32.gmra.mxu0 %v359
  %v771 = vpop.f32.mrf.mxu0
  %v772 = vadd.f32 %v148, %v771
  %773 = vmatmul.f32.gmra.mxu0 %v362
  %v774 = vpop.f32.mrf.mxu0
  %v775 = vadd.f32 %v148, %v774
  %776 = vmatmul.f32.gmra.mxu0 %v365
  %v777 = vpop.f32.mrf.mxu0
  %v778 = vadd.f32 %v148, %v777
  %779 = vmatmul.f32.gmra.mxu0 %v368
  %v780 = vpop.f32.mrf.mxu0
  %v781 = vadd.f32 %v148, %v780
  %782 = vmatmul.f32.gmra.mxu0 %v371
  %v783 = vpop.f32.mrf.mxu0
  %v784 = vadd.f32 %v148, %v783
  %785 = vmatmul.f32.gmra.mxu0 %v374
  %v786 = vpop.f32.mrf.mxu0
  %v787 = vadd.f32 %v148, %v786
  %788 = vmatmul.f32.gmra.mxu0 %v377
  %v789 = vpop.f32.mrf.mxu0
  %v790 = vadd.f32 %v148, %v789
  %791 = vmatmul.f32.gmra.mxu0 %v380
  %v792 = vpop.f32.mrf.mxu0
  %v793 = vadd.f32 %v148, %v792
  %794 = vmatmul.f32.gmra.mxu0 %v383
  %v795 = vpop.f32.mrf.mxu0
  %v796 = vadd.f32 %v148, %v795
  %797 = vmatmul.f32.gmra.mxu0 %v386
  %v798 = vpop.f32.mrf.mxu0
  %v799 = vadd.f32 %v148, %v798
  %800 = vmatmul.f32.gmra.mxu0 %v389
  %v801 = vpop.f32.mrf.mxu0
  %v802 = vadd.f32 %v148, %v801
  %803 = vmatmul.f32.gmra.mxu0 %v392
  %v804 = vpop.f32.mrf.mxu0
  %v805 = vadd.f32 %v148, %v804
  %806 = vmatmul.f32.gmra.mxu0 %v395
  %v807 = vpop.f32.mrf.mxu0
  %v808 = vadd.f32 %v148, %v807
  %809 = vmatmul.f32.gmra.mxu0 %v398
  %v810 = vpop.f32.mrf.mxu0
  %v811 = vadd.f32 %v148, %v810
  %812 = vmatmul.f32.gmra.mxu0 %v401
  %v813 = vpop.f32.mrf.mxu0
  %v814 = vadd.f32 %v148, %v813
  %815 = vmatmul.f32.gmra.mxu0 %v404
  %v816 = vpop.f32.mrf.mxu0
  %v817 = vadd.f32 %v148, %v816
  %818 = vmatmul.f32.gmra.mxu0 %v407
  %v819 = vpop.f32.mrf.mxu0
  %v820 = vadd.f32 %v148, %v819
  %821 = vmatmul.f32.gmra.mxu0 %v410
  %v822 = vpop.f32.mrf.mxu0
  %v823 = vadd.f32 %v148, %v822
  %824 = vmatmul.f32.gmra.mxu0 %v413
  %v825 = vpop.f32.mrf.mxu0
  %v826 = vadd.f32 %v148, %v825
  %827 = vmatmul.f32.gmra.mxu0 %v416
  %v828 = vpop.f32.mrf.mxu0
  %v829 = vadd.f32 %v148, %v828
  %830 = vmatmul.f32.gmra.mxu0 %v419
  %v831 = vpop.f32.mrf.mxu0
  %v832 = vadd.f32 %v148, %v831
  %833 = vmatmul.f32.gmra.mxu0 %v422
  %v834 = vpop.f32.mrf.mxu0
  %v835 = vadd.f32 %v148, %v834
  %836 = vmatmul.f32.gmra.mxu0 %v425
  %v837 = vpop.f32.mrf.mxu0
  %v838 = vadd.f32 %v148, %v837
  %839 = vmatmul.f32.gmra.mxu0 %v428
  %v840 = vpop.f32.mrf.mxu0
  %v841 = vadd.f32 %v148, %v840
  %842 = vmatmul.f32.gmra.mxu0 %v431
  %v843 = vpop.f32.mrf.mxu0
  %v844 = vadd.f32 %v148, %v843
  %845 = vmatmul.f32.gmra.mxu0 %v434
  %v846 = vpop.f32.mrf.mxu0
  %v847 = vadd.f32 %v148, %v846
  %848 = vmatmul.f32.gmra.mxu0 %v437
  %v849 = vpop.f32.mrf.mxu0
  %v850 = vadd.f32 %v148, %v849
  %851 = vmatmul.f32.gmra.mxu0 %v440
  %v852 = vpop.f32.mrf.mxu0
  %v853 = vadd.f32 %v148, %v852
  %854 = vmatmul.f32.gmra.mxu0 %v443
  %v855 = vpop.f32.mrf.mxu0
  %v856 = vadd.f32 %v148, %v855
  %857 = vmatmul.f32.gmra.mxu0 %v446
  %v858 = vpop.f32.mrf.mxu0
  %v859 = vadd.f32 %v148, %v858
  %860 = vmatmul.f32.gmra.mxu0 %v449
  %v861 = vpop.f32.mrf.mxu0
  %v862 = vadd.f32 %v148, %v861
  %863 = vmatmul.f32.gmra.mxu0 %v452
  %v864 = vpop.f32.mrf.mxu0
  %v865 = vadd.f32 %v148, %v864
  %866 = vmatmul.f32.gmra.mxu0 %v455
  %v867 = vpop.f32.mrf.mxu0
  %v868 = vadd.f32 %v148, %v867
  %869 = vmatmul.f32.gmra.mxu0 %v458
  %v870 = vpop.f32.mrf.mxu0
  %v871 = vadd.f32 %v148, %v870
  %872 = vmatmul.f32.gmra.mxu0 %v461
  %v873 = vpop.f32.mrf.mxu0
  %v874 = vadd.f32 %v148, %v873
  %875 = vmatmul.f32.gmra.mxu0 %v464
  %v876 = vpop.f32.mrf.mxu0
  %v877 = vadd.f32 %v148, %v876
  %878 = vmatmul.f32.gmra.mxu0 %v467
  %v879 = vpop.f32.mrf.mxu0
  %v880 = vadd.f32 %v148, %v879
  %881 = vmatmul.f32.gmra.mxu0 %v470
  %v882 = vpop.f32.mrf.mxu0
  %v883 = vadd.f32 %v148, %v882
  %884 = vmatmul.f32.gmra.mxu0 %v473
  %v885 = vpop.f32.mrf.mxu0
  %v886 = vadd.f32 %v148, %v885
  %887 = vmatmul.f32.gmra.mxu0 %v476
  %v888 = vpop.f32.mrf.mxu0
  %v889 = vadd.f32 %v148, %v888
  %890 = vmatmul.f32.gmra.mxu0 %v479
  %v891 = vpop.f32.mrf.mxu0
  %v892 = vadd.f32 %v148, %v891
  %893 = vmatmul.f32.gmra.mxu0 %v482
  %v894 = vpop.f32.mrf.mxu0
  %v895 = vadd.f32 %v148, %v894
  %896 = vmatmul.f32.gmra.mxu0 %v485
  %v897 = vpop.f32.mrf.mxu0
  %v898 = vadd.f32 %v148, %v897
  %899 = vmatmul.f32.gmra.mxu0 %v488
  %v900 = vpop.f32.mrf.mxu0
  %v901 = vadd.f32 %v148, %v900
  %902 = vmatmul.f32.gmra.mxu0 %v491
  %v903 = vpop.f32.mrf.mxu0
  %v904 = vadd.f32 %v148, %v903
  %905 = vmatmul.f32.gmra.mxu0 %v494
  %v906 = vpop.f32.mrf.mxu0
  %v907 = vadd.f32 %v148, %v906
  %908 = vmatmul.f32.gmra.mxu0 %v497
  %v909 = vpop.f32.mrf.mxu0
  %v910 = vadd.f32 %v148, %v909
  %911 = vmatmul.f32.gmra.mxu0 %v500
  %v912 = vpop.f32.mrf.mxu0
  %v913 = vadd.f32 %v148, %v912
  %914 = vmatmul.f32.gmra.mxu0 %v503
  %v915 = vpop.f32.mrf.mxu0
  %v916 = vadd.f32 %v148, %v915
  %917 = vmatmul.f32.gmra.mxu0 %v506
  %v918 = vpop.f32.mrf.mxu0
  %v919 = vadd.f32 %v148, %v918
  %920 = vmatmul.f32.gmra.mxu0 %v509
  %v921 = vpop.f32.mrf.mxu0
  %v922 = vadd.f32 %v148, %v921
  %923 = vmatmul.f32.gmra.mxu0 %v512
  %v924 = vpop.f32.mrf.mxu0
  %v925 = vadd.f32 %v148, %v924
  %926 = vmatmul.f32.gmra.mxu0 %v515
  %v927 = vpop.f32.mrf.mxu0
  %v928 = vadd.f32 %v148, %v927
  %929 = vmatmul.f32.gmra.mxu0 %v518
  %v930 = vpop.f32.mrf.mxu0
  %v931 = vadd.f32 %v148, %v930
  %932 = vmatmul.f32.gmra.mxu0 %v521
  %v933 = vpop.f32.mrf.mxu0
  %v934 = vadd.f32 %v148, %v933
  %935 = vmatmul.f32.gmra.mxu0 %v524
  %v936 = vpop.f32.mrf.mxu0
  %v937 = vadd.f32 %v148, %v936
  %938 = vmatmul.f32.gmra.mxu0 %v527
  %v939 = vpop.f32.mrf.mxu0
  %v940 = vadd.f32 %v148, %v939
  %941 = vmatmul.f32.gmra.mxu0 %v530
  %v942 = vpop.f32.mrf.mxu0
  %v943 = vadd.f32 %v148, %v942
  %944 = vmatmul.f32.gmra.mxu0 %v533
  %v945 = vpop.f32.mrf.mxu0
  %v946 = vadd.f32 %v148, %v945
  %947 = vdwg.mxu0
  %948 = vst.msk [vmem:[%s3] sm:$0xff] %vm150, %v565
  %949 = vst.msk [vmem:[%s3 + $0x8] sm:$0xff] %vm150, %v568
  %950 = vst.msk [vmem:[%s3 + $0x10] sm:$0xff] %vm150, %v571
  %951 = vst.msk [vmem:[%s3 + $0x18] sm:$0xff] %vm150, %v574
  %952 = vst.msk [vmem:[%s3 + $0x20] sm:$0xff] %vm150, %v577
  %953 = vst.msk [vmem:[%s3 + $0x28] sm:$0xff] %vm150, %v580
  %954 = vst.msk [vmem:[%s3 + $0x30] sm:$0xff] %vm150, %v583
  %955 = vst.msk [vmem:[%s3 + $0x38] sm:$0xff] %vm150, %v586
  %956 = vst.msk [vmem:[%s3 + $0x40] sm:$0xff] %vm150, %v589
  %957 = vst.msk [vmem:[%s3 + $0x48] sm:$0xff] %vm150, %v592
  %958 = vst.msk [vmem:[%s3 + $0x50] sm:$0xff] %vm150, %v595
  %959 = vst.msk [vmem:[%s3 + $0x58] sm:$0xff] %vm150, %v598
  %960 = vst.msk [vmem:[%s3 + $0x60] sm:$0xff] %vm150, %v601
  %961 = vst.msk [vmem:[%s3 + $0x68] sm:$0xff] %vm150, %v604
  %962 = vst.msk [vmem:[%s3 + $0x70] sm:$0xff] %vm150, %v607
  %963 = vst.msk [vmem:[%s3 + $0x78] sm:$0xff] %vm150, %v610
  %964 = vst.msk [vmem:[%s3 + $0x80] sm:$0xff] %vm150, %v613
  %965 = vst.msk [vmem:[%s3 + $0x88] sm:$0xff] %vm150, %v616
  %966 = vst.msk [vmem:[%s3 + $0x90] sm:$0xff] %vm150, %v619
  %967 = vst.msk [vmem:[%s3 + $0x98] sm:$0xff] %vm150, %v622
  %968 = vst.msk [vmem:[%s3 + $0xa0] sm:$0xff] %vm150, %v625
  %969 = vst.msk [vmem:[%s3 + $0xa8] sm:$0xff] %vm150, %v628
  %970 = vst.msk [vmem:[%s3 + $0xb0] sm:$0xff] %vm150, %v631
  %971 = vst.msk [vmem:[%s3 + $0xb8] sm:$0xff] %vm150, %v634
  %972 = vst.msk [vmem:[%s3 + $0xc0] sm:$0xff] %vm150, %v637
  %973 = vst.msk [vmem:[%s3 + $0xc8] sm:$0xff] %vm150, %v640
  %974 = vst.msk [vmem:[%s3 + $0xd0] sm:$0xff] %vm150, %v643
  %975 = vst.msk [vmem:[%s3 + $0xd8] sm:$0xff] %vm150, %v646
  %976 = vst.msk [vmem:[%s3 + $0xe0] sm:$0xff] %vm150, %v649
  %977 = vst.msk [vmem:[%s3 + $0xe8] sm:$0xff] %vm150, %v652
  %978 = vst.msk [vmem:[%s3 + $0xf0] sm:$0xff] %vm150, %v655
  %979 = vst.msk [vmem:[%s3 + $0xf8] sm:$0xff] %vm150, %v658
  %980 = vst.msk [vmem:[%s3 + $0x100] sm:$0xff] %vm150, %v661
  %981 = vst.msk [vmem:[%s3 + $0x108] sm:$0xff] %vm150, %v664
  %982 = vst.msk [vmem:[%s3 + $0x110] sm:$0xff] %vm150, %v667
  %983 = vst.msk [vmem:[%s3 + $0x118] sm:$0xff] %vm150, %v670
  %984 = vst.msk [vmem:[%s3 + $0x120] sm:$0xff] %vm150, %v673
  %985 = vst.msk [vmem:[%s3 + $0x128] sm:$0xff] %vm150, %v676
  %986 = vst.msk [vmem:[%s3 + $0x130] sm:$0xff] %vm150, %v679
  %987 = vst.msk [vmem:[%s3 + $0x138] sm:$0xff] %vm150, %v682
  %988 = vst.msk [vmem:[%s3 + $0x140] sm:$0xff] %vm150, %v685
  %989 = vst.msk [vmem:[%s3 + $0x148] sm:$0xff] %vm150, %v688
  %990 = vst.msk [vmem:[%s3 + $0x150] sm:$0xff] %vm150, %v691
  %991 = vst.msk [vmem:[%s3 + $0x158] sm:$0xff] %vm150, %v694
  %992 = vst.msk [vmem:[%s3 + $0x160] sm:$0xff] %vm150, %v697
  %993 = vst.msk [vmem:[%s3 + $0x168] sm:$0xff] %vm150, %v700
  %994 = vst.msk [vmem:[%s3 + $0x170] sm:$0xff] %vm150, %v703
  %995 = vst.msk [vmem:[%s3 + $0x178] sm:$0xff] %vm150, %v706
  %996 = vst.msk [vmem:[%s3 + $0x180] sm:$0xff] %vm150, %v709
  %997 = vst.msk [vmem:[%s3 + $0x188] sm:$0xff] %vm150, %v712
  %998 = vst.msk [vmem:[%s3 + $0x190] sm:$0xff] %vm150, %v715
  %999 = vst.msk [vmem:[%s3 + $0x198] sm:$0xff] %vm150, %v718
  %1000 = vst.msk [vmem:[%s3 + $0x1a0] sm:$0xff] %vm150, %v721
  %1001 = vst.msk [vmem:[%s3 + $0x1a8] sm:$0xff] %vm150, %v724
  %1002 = vst.msk [vmem:[%s3 + $0x1b0] sm:$0xff] %vm150, %v727
  %1003 = vst.msk [vmem:[%s3 + $0x1b8] sm:$0xff] %vm150, %v730
  %1004 = vst.msk [vmem:[%s3 + $0x1c0] sm:$0xff] %vm150, %v733
  %1005 = vst.msk [vmem:[%s3 + $0x1c8] sm:$0xff] %vm150, %v736
  %1006 = vst.msk [vmem:[%s3 + $0x1d0] sm:$0xff] %vm150, %v739
  %1007 = vst.msk [vmem:[%s3 + $0x1d8] sm:$0xff] %vm150, %v742
  %1008 = vst.msk [vmem:[%s3 + $0x1e0] sm:$0xff] %vm150, %v745
  %1009 = vst.msk [vmem:[%s3 + $0x1e8] sm:$0xff] %vm150, %v748
  %1010 = vst.msk [vmem:[%s3 + $0x1f0] sm:$0xff] %vm150, %v751
  %1011 = vst.msk [vmem:[%s3 + $0x1f8] sm:$0xff] %vm150, %v754
  %1012 = vst.msk [vmem:[%s3 + $0x200] sm:$0xff] %vm150, %v757
  %1013 = vst.msk [vmem:[%s3 + $0x208] sm:$0xff] %vm150, %v760
  %1014 = vst.msk [vmem:[%s3 + $0x210] sm:$0xff] %vm150, %v763
  %1015 = vst.msk [vmem:[%s3 + $0x218] sm:$0xff] %vm150, %v766
  %1016 = vst.msk [vmem:[%s3 + $0x220] sm:$0xff] %vm150, %v769
  %1017 = vst.msk [vmem:[%s3 + $0x228] sm:$0xff] %vm150, %v772
  %1018 = vst.msk [vmem:[%s3 + $0x230] sm:$0xff] %vm150, %v775
  %1019 = vst.msk [vmem:[%s3 + $0x238] sm:$0xff] %vm150, %v778
  %1020 = vst.msk [vmem:[%s3 + $0x240] sm:$0xff] %vm150, %v781
  %1021 = vst.msk [vmem:[%s3 + $0x248] sm:$0xff] %vm150, %v784
  %1022 = vst.msk [vmem:[%s3 + $0x250] sm:$0xff] %vm150, %v787
  %1023 = vst.msk [vmem:[%s3 + $0x258] sm:$0xff] %vm150, %v790
  %1024 = vst.msk [vmem:[%s3 + $0x260] sm:$0xff] %vm150, %v793
  %1025 = vst.msk [vmem:[%s3 + $0x268] sm:$0xff] %vm150, %v796
  %1026 = vst.msk [vmem:[%s3 + $0x270] sm:$0xff] %vm150, %v799
  %1027 = vst.msk [vmem:[%s3 + $0x278] sm:$0xff] %vm150, %v802
  %1028 = vst.msk [vmem:[%s3 + $0x280] sm:$0xff] %vm150, %v805
  %1029 = vst.msk [vmem:[%s3 + $0x288] sm:$0xff] %vm150, %v808
  %1030 = vst.msk [vmem:[%s3 + $0x290] sm:$0xff] %vm150, %v811
  %1031 = vst.msk [vmem:[%s3 + $0x298] sm:$0xff] %vm150, %v814
  %1032 = vst.msk [vmem:[%s3 + $0x2a0] sm:$0xff] %vm150, %v817
  %1033 = vst.msk [vmem:[%s3 + $0x2a8] sm:$0xff] %vm150, %v820
  %1034 = vst.msk [vmem:[%s3 + $0x2b0] sm:$0xff] %vm150, %v823
  %1035 = vst.msk [vmem:[%s3 + $0x2b8] sm:$0xff] %vm150, %v826
  %1036 = vst.msk [vmem:[%s3 + $0x2c0] sm:$0xff] %vm150, %v829
  %1037 = vst.msk [vmem:[%s3 + $0x2c8] sm:$0xff] %vm150, %v832
  %1038 = vst.msk [vmem:[%s3 + $0x2d0] sm:$0xff] %vm150, %v835
  %1039 = vst.msk [vmem:[%s3 + $0x2d8] sm:$0xff] %vm150, %v838
  %1040 = vst.msk [vmem:[%s3 + $0x2e0] sm:$0xff] %vm150, %v841
  %1041 = vst.msk [vmem:[%s3 + $0x2e8] sm:$0xff] %vm150, %v844
  %1042 = vst.msk [vmem:[%s3 + $0x2f0] sm:$0xff] %vm150, %v847
  %1043 = vst.msk [vmem:[%s3 + $0x2f8] sm:$0xff] %vm150, %v850
  %1044 = vst.msk [vmem:[%s3 + $0x300] sm:$0xff] %vm150, %v853
  %1045 = vst.msk [vmem:[%s3 + $0x308] sm:$0xff] %vm150, %v856
  %1046 = vst.msk [vmem:[%s3 + $0x310] sm:$0xff] %vm150, %v859
  %1047 = vst.msk [vmem:[%s3 + $0x318] sm:$0xff] %vm150, %v862
  %1048 = vst.msk [vmem:[%s3 + $0x320] sm:$0xff] %vm150, %v865
  %1049 = vst.msk [vmem:[%s3 + $0x328] sm:$0xff] %vm150, %v868
  %1050 = vst.msk [vmem:[%s3 + $0x330] sm:$0xff] %vm150, %v871
  %1051 = vst.msk [vmem:[%s3 + $0x338] sm:$0xff] %vm150, %v874
  %1052 = vst.msk [vmem:[%s3 + $0x340] sm:$0xff] %vm150, %v877
  %1053 = vst.msk [vmem:[%s3 + $0x348] sm:$0xff] %vm150, %v880
  %1054 = vst.msk [vmem:[%s3 + $0x350] sm:$0xff] %vm150, %v883
  %1055 = vst.msk [vmem:[%s3 + $0x358] sm:$0xff] %vm150, %v886
  %1056 = vst.msk [vmem:[%s3 + $0x360] sm:$0xff] %vm150, %v889
  %1057 = vst.msk [vmem:[%s3 + $0x368] sm:$0xff] %vm150, %v892
  %1058 = vst.msk [vmem:[%s3 + $0x370] sm:$0xff] %vm150, %v895
  %1059 = vst.msk [vmem:[%s3 + $0x378] sm:$0xff] %vm150, %v898
  %1060 = vst.msk [vmem:[%s3 + $0x380] sm:$0xff] %vm150, %v901
  %1061 = vst.msk [vmem:[%s3 + $0x388] sm:$0xff] %vm150, %v904
  %1062 = vst.msk [vmem:[%s3 + $0x390] sm:$0xff] %vm150, %v907
  %1063 = vst.msk [vmem:[%s3 + $0x398] sm:$0xff] %vm150, %v910
  %1064 = vst.msk [vmem:[%s3 + $0x3a0] sm:$0xff] %vm150, %v913
  %1065 = vst.msk [vmem:[%s3 + $0x3a8] sm:$0xff] %vm150, %v916
  %1066 = vst.msk [vmem:[%s3 + $0x3b0] sm:$0xff] %vm150, %v919
  %1067 = vst.msk [vmem:[%s3 + $0x3b8] sm:$0xff] %vm150, %v922
  %1068 = vst.msk [vmem:[%s3 + $0x3c0] sm:$0xff] %vm150, %v925
  %1069 = vst.msk [vmem:[%s3 + $0x3c8] sm:$0xff] %vm150, %v928
  %1070 = vst.msk [vmem:[%s3 + $0x3d0] sm:$0xff] %vm150, %v931
  %1071 = vst.msk [vmem:[%s3 + $0x3d8] sm:$0xff] %vm150, %v934
  %1072 = vst.msk [vmem:[%s3 + $0x3e0] sm:$0xff] %vm150, %v937
  %1073 = vst.msk [vmem:[%s3 + $0x3e8] sm:$0xff] %vm150, %v940
  %1074 = vst.msk [vmem:[%s3 + $0x3f0] sm:$0xff] %vm150, %v943
  %1075 = vst.msk [vmem:[%s3 + $0x3f8] sm:$0xff] %vm150, %v946
  // Predicated region
  $region14: #{nge_forward.1} parent=0 // pred_check
    _
  $region15: #{nge_forward.1} parent=0 // pred_check_branch
    %1077 = sbr.rel (0) target = $region17
  $region16: #{nge_forward.1} parent=0 // pred_region
    _
  $region17: #{nge_forward.1} parent=0 // pred_fallthru
    _
  // Predicated region
  $region18: #{nge_forward.1} parent=0 // pred_check
    _
  $region19: #{nge_forward.1} parent=0 // pred_check_branch
    %1079 = sbr.rel (0) target = $region21
  $region20: #{nge_forward.1} parent=0 // pred_region
    _
  $region21: #{nge_forward.1} parent=0 // pred_fallthru
    _

</llo_original>
